<compile_context>
chip_gen: v7x
topology: tpu7x:2x2x1
jax: 0.10.0
libtpu: 0.0.40
codegen_flags: <defaults>
</compile_context>

<pallas_src>
import functools

import jax
import jax.numpy as jnp
from jax.experimental import pallas as pl
from jax.experimental.pallas import tpu as pltpu


def _round_up(x, m):
    return ((x + m - 1) // m) * m


def _emitter_kernel(z_ref, w1_ref, b1_ref, w2_ref, b2_ref, w3_ref, b3_ref,
                    o_ref, *, approx_sigmoid):
    # z_ref:  (TB, Z)       w1_ref: (Z, Ep)   b1_ref: (1, Ep)  [f32]
    # w2_ref: (Ep, Ep)      b2_ref: (1, Ep)   [f32]
    # w3_ref: (Ep, D)       b3_ref: (1, D)    [f32]
    # o_ref:  (TB, D)
    #
    # Matmuls run in the operands' native dtype (bf16 -> native MXU path) and
    # accumulate in f32; biases + activations in f32.
    z = z_ref[...]

    h1 = jnp.dot(z, w1_ref[...], preferred_element_type=jnp.float32) + b1_ref[...]
    h1 = jnp.maximum(h1, 0.0).astype(w2_ref.dtype)

    h2 = jnp.dot(h1, w2_ref[...], preferred_element_type=jnp.float32) + b2_ref[...]
    h2 = jnp.maximum(h2, 0.0).astype(w3_ref.dtype)

    logits = jnp.dot(h2, w3_ref[...], preferred_element_type=jnp.float32) + b3_ref[...]

    denom = 1.0 + jnp.exp(-logits)          # exp on the EUP
    if approx_sigmoid:
        ps = pl.reciprocal(denom, approx=True)   # EUP; fine for bf16 outputs
    else:
        ps = 1.0 / denom                          # exact sigmoid for f32 outputs

    o_ref[...] = ps.astype(o_ref.dtype)


def prepare_params(params, compute_dtype=jnp.float32):
    """Cast / reshape / zero-pad params once (hoist out of the hot path).

    - Weights cast to `compute_dtype` (pass jnp.bfloat16 for the native bf16
      MXU path); biases kept f32 (bias-add happens on f32 accumulations).
    - Hidden dim E is zero-padded up to a multiple of 128 so intermediates are
      lane-dense.  Mathematically identical: padded bias entries are 0,
      ReLU(0)=0, and the padded rows of w3 are 0.
    """
    w1, b1, w2, b2, w3, b3 = params
    Z, E = w1.shape
    D = w3.shape[1]
    Ep = _round_up(E, 128)
    pe = Ep - E
    cd = jnp.dtype(compute_dtype)

    w1p = jnp.pad(w1.astype(cd), ((0, 0), (0, pe)))
    b1p = jnp.pad(b1.astype(jnp.float32), (0, pe)).reshape(1, Ep)
    w2p = jnp.pad(w2.astype(cd), ((0, pe), (0, pe)))
    b2p = jnp.pad(b2.astype(jnp.float32), (0, pe)).reshape(1, Ep)
    w3p = jnp.pad(w3.astype(cd), ((0, pe), (0, 0)))
    b3p = b3.astype(jnp.float32).reshape(1, D)
    return (w1p, b1p, w2p, b2p, w3p, b3p)


def _vmem_limit_bytes():
    # Physical VMEM: 128 MiB on v5e/v6e, 64 MiB per TC on v7x.  Leave ~25%
    # headroom for compiler internals / pipeline machinery.
    phys = 64 * 1024 * 1024
    try:
        info = pltpu.get_tpu_info()
        phys = int(getattr(info, "vmem_capacity_bytes", phys))
    except Exception:
        pass
    return int(min(phys * 3 // 4, 96 * 1024 * 1024))


def bernoulli_emitter(z_t, params, *, tile_b=None, prepared=False):
    """z_t: [B, z_dim] -> ps: [B, input_dim] (same dtype as z_t).

    Pass bf16 z_t (and params prepared with compute_dtype=jnp.bfloat16) for
    the native bf16 MXU path and halved HBM I/O; f32 stays exact.  NOTE: the
    non-prepared convenience path casts the weights to z_t.dtype — callers
    needing f32-critical weights with bf16 activations should call
    prepare_params explicitly.
    """
    compute_dtype = z_t.dtype
    if not prepared:
        params = prepare_params(params, compute_dtype)
    w1p, b1p, w2p, b2p, w3p, b3p = params

    B, Z = z_t.shape
    Ep = w1p.shape[1]
    D = w3p.shape[1]
    act_bytes = jnp.dtype(compute_dtype).itemsize

    vmem_limit = _vmem_limit_bytes()
    budget = vmem_limit - 4 * 1024 * 1024

    # Resident weights/biases: constant index_maps keep them in VMEM, but the
    # default pipeline still reserves double buffers for them (2x).
    weight_bytes = 2 * ((Z * Ep + Ep * Ep + Ep * D) * act_bytes + (2 * Ep + D) * 4)
    if weight_bytes > budget:
        # TODO(synk): tile the hidden (E) dimension / split layers across
        # calls instead of bailing when the weights alone exceed VMEM.
        raise ValueError(
            f"resident weights ({weight_bytes} B) exceed the VMEM budget "
            f"({budget} B); emission_dim too large for this fused kernel")

    def fits(tb):
        io_bytes = 2 * tb * (Z + D) * act_bytes            # double-buffered z/out tiles
        interm = tb * (2 * Ep + D) * 4                      # f32 h1 / h2 / logits
        interm += 2 * tb * Ep * act_bytes                   # low-precision h1/h2 MXU copies
        return weight_bytes + io_bytes + interm <= budget

    # --- tile selection -----------------------------------------------------
    if tile_b is None:
        if B <= 64:
            tile_b = B                       # one block == full batch dim (always legal)
        else:
            # >= 2 grid steps so ("parallel",) can use both v7x TensorCores;
            # cap high (2048): at these feature dims the kernel is per-step
            # overhead / HBM bound, not DMA-limited.
            tile_b = min(2048, _round_up(-(-B // 2), 32))
    tile_b = int(tile_b)

    if tile_b >= B:
        tile_b = B
    else:
        tile_b = max(32, _round_up(tile_b, 32))
        while tile_b > 32 and not fits(tile_b):
            tile_b -= 32
        if tile_b >= B:
            tile_b = B
        elif B % tile_b != 0:
            # Prefer a tile that divides B (no ragged last block / masked
            # partial stores); don't shrink below half the chosen tile.
            for cand in range(tile_b - 32, tile_b // 2 - 1, -32):
                if cand >= 32 and B % cand == 0:
                    tile_b = cand
                    break
            # else: rely on Pallas ragged last-block handling (padded reads,
            # dropped OOB writes) — no jnp.pad / out[:B] HBM round-trips.

    grid_b = -(-B // tile_b)

    cost = pl.CostEstimate(
        flops=2 * B * (Z * Ep + Ep * Ep + Ep * D),
        transcendentals=B * D,
        bytes_accessed=B * (Z + D) * act_bytes
        + (Z * Ep + Ep * Ep + Ep * D) * act_bytes
        + (2 * Ep + D) * 4,
    )

    kernel = functools.partial(
        _emitter_kernel,
        approx_sigmoid=(jnp.dtype(compute_dtype) != jnp.float32),
    )

    return pl.pallas_call(
        kernel,
        out_shape=jax.ShapeDtypeStruct((B, D), compute_dtype),
        grid_spec=pl.GridSpec(
            grid=(grid_b,),
            in_specs=[
                pl.BlockSpec((tile_b, Z), lambda i: (i, 0)),   # z tile
                pl.BlockSpec((Z, Ep), lambda i: (0, 0)),       # w1 (resident)
                pl.BlockSpec((1, Ep), lambda i: (0, 0)),       # b1
                pl.BlockSpec((Ep, Ep), lambda i: (0, 0)),      # w2
                pl.BlockSpec((1, Ep), lambda i: (0, 0)),       # b2
                pl.BlockSpec((Ep, D), lambda i: (0, 0)),       # w3
                pl.BlockSpec((1, D), lambda i: (0, 0)),        # b3
            ],
            out_specs=pl.BlockSpec((tile_b, D), lambda i: (i, 0)),
        ),
        compiler_params=pltpu.CompilerParams(
            dimension_semantics=("parallel",),
            vmem_limit_bytes=vmem_limit,
        ),
        cost_estimate=cost,
    )(z_t, w1p, b1p, w2p, b2p, w3p, b3p)


def init_params(key, z_dim, emission_dim, input_dim, dtype=jnp.float32):
    """Deterministic synthetic params. Weights stored as [in, out]."""
    k1, k2, k3, k4, k5, k6 = jax.random.split(key, 6)
    s1 = 1.0 / jnp.sqrt(z_dim)
    s2 = 1.0 / jnp.sqrt(emission_dim)
    w1 = jax.random.uniform(k1, (z_dim, emission_dim), dtype, -s1, s1)
    b1 = jax.random.uniform(k2, (emission_dim,), dtype, -s1, s1)
    w2 = jax.random.uniform(k3, (emission_dim, emission_dim), dtype, -s2, s2)
    b2 = jax.random.uniform(k4, (emission_dim,), dtype, -s2, s2)
    w3 = jax.random.uniform(k5, (emission_dim, input_dim), dtype, -s2, s2)
    b3 = jax.random.uniform(k6, (input_dim,), dtype, -s2, s2)
    return (w1, b1, w2, b2, w3, b3)


def bernoulli_emitter_ref(z_t, params):
    w1, b1, w2, b2, w3, b3 = params
    h1 = jax.nn.relu(z_t @ w1 + b1)
    h2 = jax.nn.relu(h1 @ w2 + b2)
    return jax.nn.sigmoid(h2 @ w3 + b3)


if __name__ == "__main__":
    key = jax.random.PRNGKey(0)
    k_z, k_p = jax.random.split(key)

    batch, z_dim, emission_dim, input_dim = 8, 32, 64, 128
    z_t = jax.random.normal(k_z, (batch, z_dim), jnp.float32)
    params = init_params(k_p, z_dim, emission_dim, input_dim)

    # 1) f32 path, small batch (single block), raw-param convenience path.
    #    f32 output now uses the exact sigmoid (no approx reciprocal).
    ps = jax.block_until_ready(bernoulli_emitter(z_t, params))
    ps_ref = bernoulli_emitter_ref(z_t, params)
    assert ps.shape == (batch, input_dim)
    assert ps.dtype == jnp.float32
    assert jnp.allclose(ps, ps_ref, atol=2e-3, rtol=0.0), \
        float(jnp.max(jnp.abs(ps - ps_ref)))

    # 2) bf16 path with pre-prepared (cast/padded/reshaped) params, batch not
    #    a multiple of 32 (full-batch single block, no padding round-trips).
    prepared_bf16 = prepare_params(params, jnp.bfloat16)
    batch2 = 48
    z2_f32 = jax.random.normal(jax.random.PRNGKey(1), (batch2, z_dim), jnp.float32)
    ps2 = jax.block_until_ready(
        bernoulli_emitter(z2_f32.astype(jnp.bfloat16), prepared_bf16, prepared=True))
    ps2_ref = bernoulli_emitter_ref(z2_f32, params)
    assert ps2.shape == (batch2, input_dim)
    assert ps2.dtype == jnp.bfloat16
    assert jnp.allclose(ps2.astype(jnp.float32), ps2_ref, atol=3e-2, rtol=0.0), \
        float(jnp.max(jnp.abs(ps2.astype(jnp.float32) - ps2_ref)))

    # 3) Larger batch -> multi-step grid (2 steps of 128), exercises the
    #    "parallel" sharding path with resident weights and no batch padding.
    prepared_f32 = prepare_params(params, jnp.float32)
    batch3 = 256
    z3 = jax.random.normal(jax.random.PRNGKey(2), (batch3, z_dim), jnp.float32)
    ps3 = jax.block_until_ready(
        bernoulli_emitter(z3, prepared_f32, prepared=True))
    ps3_ref = bernoulli_emitter_ref(z3, params)
    assert ps3.shape == (batch3, input_dim)
    assert jnp.allclose(ps3, ps3_ref, atol=2e-3, rtol=0.0), \
        float(jnp.max(jnp.abs(ps3 - ps3_ref)))

    print("KERNEL_OK")
</pallas_src>

<mosaic_0001>
module attributes {stable_mosaic.version = 11 : i64} {
  func.func @_emitter_kernel(%arg0: i32, %arg1: memref<8x32xf32, #tpu.memory_space<vmem>>, %arg2: memref<32x128xf32, #tpu.memory_space<vmem>>, %arg3: memref<1x128xf32, #tpu.memory_space<vmem>>, %arg4: memref<128x128xf32, #tpu.memory_space<vmem>>, %arg5: memref<1x128xf32, #tpu.memory_space<vmem>>, %arg6: memref<128x128xf32, #tpu.memory_space<vmem>>, %arg7: memref<1x128xf32, #tpu.memory_space<vmem>>, %arg8: memref<8x128xf32, #tpu.memory_space<vmem>>) attributes {dimension_semantics = [#tpu.dimension_semantics<parallel>], iteration_bounds = array<i64: 1>, scalar_prefetch = 0 : i64, scratch_operands = 0 : i64, tpu.core_type = #tpu.core_type<tc>, window_params = [{transform_indices = @transform_0, window_bounds = array<i64: 8, 32>}, {pipeline_mode = #tpu.pipeline_mode<synchronous>, transform_indices = @transform_1, window_bounds = array<i64: 32, 128>}, {pipeline_mode = #tpu.pipeline_mode<synchronous>, transform_indices = @transform_2, window_bounds = array<i64: 1, 128>}, {pipeline_mode = #tpu.pipeline_mode<synchronous>, transform_indices = @transform_3, window_bounds = array<i64: 128, 128>}, {pipeline_mode = #tpu.pipeline_mode<synchronous>, transform_indices = @transform_4, window_bounds = array<i64: 1, 128>}, {pipeline_mode = #tpu.pipeline_mode<synchronous>, transform_indices = @transform_5, window_bounds = array<i64: 128, 128>}, {pipeline_mode = #tpu.pipeline_mode<synchronous>, transform_indices = @transform_6, window_bounds = array<i64: 1, 128>}, {transform_indices = @transform_7, window_bounds = array<i64: 8, 128>}]} {
    %c0 = arith.constant 0 : index
    %c0_0 = arith.constant 0 : index
    %0 = vector.load %arg1[%c0, %c0_0] : memref<8x32xf32, #tpu.memory_space<vmem>>, vector<8x32xf32>
    %c0_1 = arith.constant 0 : index
    %c0_2 = arith.constant 0 : index
    %1 = vector.load %arg2[%c0_1, %c0_2] : memref<32x128xf32, #tpu.memory_space<vmem>>, vector<32x128xf32>
    %cst = arith.constant dense<0.000000e+00> : vector<8x128xf32>
    %2 = tpu.matmul %0, %1, %cst {dimension_numbers = #tpu.dot_dimension_numbers<[1], [0], [0], [1], [0, 0, 1, 1], [], []>} : vector<8x32xf32>, vector<32x128xf32>, vector<8x128xf32> -> vector<8x128xf32>
    %c0_3 = arith.constant 0 : index
    %c0_4 = arith.constant 0 : index
    %3 = vector.load %arg3[%c0_3, %c0_4] : memref<1x128xf32, #tpu.memory_space<vmem>>, vector<1x128xf32>
    %4 = vector.broadcast %3 : vector<1x128xf32> to vector<8x128xf32>
    %5 = arith.addf %2, %4 : vector<8x128xf32>
    %cst_5 = arith.constant 0.000000e+00 : f32
    %6 = vector.broadcast %cst_5 : f32 to vector<8x128xf32>
    %7 = arith.maximumf %5, %6 : vector<8x128xf32>
    %c0_6 = arith.constant 0 : index
    %c0_7 = arith.constant 0 : index
    %8 = vector.load %arg4[%c0_6, %c0_7] : memref<128x128xf32, #tpu.memory_space<vmem>>, vector<128x128xf32>
    %cst_8 = arith.constant dense<0.000000e+00> : vector<8x128xf32>
    %9 = tpu.matmul %7, %8, %cst_8 {dimension_numbers = #tpu.dot_dimension_numbers<[1], [0], [0], [1], [0, 0, 1, 1], [], []>} : vector<8x128xf32>, vector<128x128xf32>, vector<8x128xf32> -> vector<8x128xf32>
    %c0_9 = arith.constant 0 : index
    %c0_10 = arith.constant 0 : index
    %10 = vector.load %arg5[%c0_9, %c0_10] : memref<1x128xf32, #tpu.memory_space<vmem>>, vector<1x128xf32>
    %11 = vector.broadcast %10 : vector<1x128xf32> to vector<8x128xf32>
    %12 = arith.addf %9, %11 : vector<8x128xf32>
    %cst_11 = arith.constant 0.000000e+00 : f32
    %13 = vector.broadcast %cst_11 : f32 to vector<8x128xf32>
    %14 = arith.maximumf %12, %13 : vector<8x128xf32>
    %c0_12 = arith.constant 0 : index
    %c0_13 = arith.constant 0 : index
    %15 = vector.load %arg6[%c0_12, %c0_13] : memref<128x128xf32, #tpu.memory_space<vmem>>, vector<128x128xf32>
    %cst_14 = arith.constant dense<0.000000e+00> : vector<8x128xf32>
    %16 = tpu.matmul %14, %15, %cst_14 {dimension_numbers = #tpu.dot_dimension_numbers<[1], [0], [0], [1], [0, 0, 1, 1], [], []>} : vector<8x128xf32>, vector<128x128xf32>, vector<8x128xf32> -> vector<8x128xf32>
    %c0_15 = arith.constant 0 : index
    %c0_16 = arith.constant 0 : index
    %17 = vector.load %arg7[%c0_15, %c0_16] : memref<1x128xf32, #tpu.memory_space<vmem>>, vector<1x128xf32>
    %18 = vector.broadcast %17 : vector<1x128xf32> to vector<8x128xf32>
    %19 = arith.addf %16, %18 : vector<8x128xf32>
    %cst_17 = arith.constant 0.000000e+00 : f32
    %20 = vector.broadcast %cst_17 : f32 to vector<8x128xf32>
    %21 = arith.subf %20, %19 : vector<8x128xf32>
    %22 = math.exp %21 : vector<8x128xf32>
    %cst_18 = arith.constant 1.000000e+00 : f32
    %23 = vector.broadcast %cst_18 : f32 to vector<8x128xf32>
    %24 = arith.addf %23, %22 : vector<8x128xf32>
    %cst_19 = arith.constant 1.000000e+00 : f32
    %25 = vector.broadcast %cst_19 : f32 to vector<8x128xf32>
    %26 = arith.divf %25, %24 : vector<8x128xf32>
    %c0_20 = arith.constant 0 : index
    %c0_21 = arith.constant 0 : index
    %27 = vector.load %arg8[%c0_20, %c0_21] : memref<8x128xf32, #tpu.memory_space<vmem>>, vector<8x128xf32>
    tpu.vector_store %arg8[%c0_20, %c0_21], %26 {strides = array<i32>} : memref<8x128xf32, #tpu.memory_space<vmem>>, vector<8x128xf32>,
    return
  }
  func.func @transform_0(%arg0: i32) -> (i32, i32) {
    %c0_i32 = arith.constant 0 : i32
    %c0_i32_0 = arith.constant 0 : i32
    return %arg0, %c0_i32 : i32, i32
  }
  func.func @transform_1(%arg0: i32) -> (i32, i32) {
    %c0_i32 = arith.constant 0 : i32
    %c0_i32_0 = arith.constant 0 : i32
    %c0_i32_1 = arith.constant 0 : i32
    return %c0_i32, %c0_i32_0 : i32, i32
  }
  func.func @transform_2(%arg0: i32) -> (i32, i32) {
    %c0_i32 = arith.constant 0 : i32
    %c0_i32_0 = arith.constant 0 : i32
    %c0_i32_1 = arith.constant 0 : i32
    return %c0_i32, %c0_i32_0 : i32, i32
  }
  func.func @transform_3(%arg0: i32) -> (i32, i32) {
    %c0_i32 = arith.constant 0 : i32
    %c0_i32_0 = arith.constant 0 : i32
    %c0_i32_1 = arith.constant 0 : i32
    return %c0_i32, %c0_i32_0 : i32, i32
  }
  func.func @transform_4(%arg0: i32) -> (i32, i32) {
    %c0_i32 = arith.constant 0 : i32
    %c0_i32_0 = arith.constant 0 : i32
    %c0_i32_1 = arith.constant 0 : i32
    return %c0_i32, %c0_i32_0 : i32, i32
  }
  func.func @transform_5(%arg0: i32) -> (i32, i32) {
    %c0_i32 = arith.constant 0 : i32
    %c0_i32_0 = arith.constant 0 : i32
    %c0_i32_1 = arith.constant 0 : i32
    return %c0_i32, %c0_i32_0 : i32, i32
  }
  func.func @transform_6(%arg0: i32) -> (i32, i32) {
    %c0_i32 = arith.constant 0 : i32
    %c0_i32_0 = arith.constant 0 : i32
    %c0_i32_1 = arith.constant 0 : i32
    return %c0_i32, %c0_i32_0 : i32, i32
  }
  func.func @transform_7(%arg0: i32) -> (i32, i32) {
    %c0_i32 = arith.constant 0 : i32
    %c0_i32_0 = arith.constant 0 : i32
    return %arg0, %c0_i32 : i32, i32
  }
}

</mosaic_0001>

<llo_original>
// kernel: tpu_custom_call.1
$region0: #{tpu_custom_call.1}
  #allocation0 [shape = 'u32[]', space=smem, size = 0x4, offset = 0x4, fixed_abs, tag = 'smem constant byte address 0x4 - core index']
  #allocation1 [shape = 'u32[144,128]{1,0:T(1,128)}', space=vmem, size = 0x12000, scoped, tag = 'internal scratch']
  %s0 = inlined_call_operand.hbm [shape: f32[8,32], index: 0, kind: input, shape index: {}]
  %s1 = inlined_call_operand.hbm [shape: f32[32,128], index: 1, kind: input, shape index: {}]
  %s2 = inlined_call_operand.vmem [shape: f32[1,128], index: 2, kind: input, shape index: {}]
  %s3 = inlined_call_operand.hbm [shape: f32[128,128], index: 3, kind: input, shape index: {}]
  %s4 = inlined_call_operand.vmem [shape: f32[1,128], index: 4, kind: input, shape index: {}]
  %s5 = inlined_call_operand.hbm [shape: f32[128,128], index: 5, kind: input, shape index: {}]
  %s6 = inlined_call_operand.vmem [shape: f32[1,128], index: 6, kind: input, shape index: {}]
  %s7 = inlined_call_operand.hbm [shape: f32[8,128], index: 7, kind: output, shape index: {}]
  %s8 = sld [smem:[#allocation0]]
  $region54: #{tpu_custom_call.1} parent=0
    _
  %s10 = ssub.s32 1, %s8
  %s11 = scalar_select 0, %s10, %s8
  $region1: #{tpu_custom_call.1} parent=0
    #allocation2 [shape = 'u8[4096]{0}', space=vmem, size = 0x1000, scoped, tag = 'input window, operand 0, single buffered']
    #allocation3 [shape = 's32[1]{0}', space=sflag, size = 0x4, scoped, tag = 'scoped memory for tpu_custom_call.1']
    #allocation4 [shape = 's32[1]{0}', space=sflag, size = 0x4, scoped, tag = 'scoped memory for tpu_custom_call.1']
    #allocation5 [shape = 'u8[16384]{0}', space=vmem, size = 0x4000, scoped, tag = 'input window, operand 1, single buffered']
    #allocation6 [shape = 's32[1]{0}', space=sflag, size = 0x4, scoped, tag = 'scoped memory for tpu_custom_call.1']
    #allocation7 [shape = 'u8[65536]{0}', space=vmem, size = 0x10000, scoped, tag = 'input window, operand 3, single buffered']
    #allocation8 [shape = 'u8[65536]{0}', space=vmem, size = 0x10000, scoped, tag = 'input window, operand 5, single buffered']
    #allocation9 [shape = 's32[1]{0}', space=sflag, size = 0x4, scoped, tag = 'scoped memory for tpu_custom_call.1']
    #allocation10 [shape = 'u8[4096]{0}', space=vmem, size = 0x1000, scoped, tag = 'output window, operand 0, single buffered']
    %12 = vsyncpa [#allocation3], 0
    %13 = vsyncpa [#allocation6], 0
    %14 = vsyncpa [#allocation9], 0
    %15 = vsyncpa [#allocation4], 0
    // Predicated region
    $region2: #{tpu_custom_call.1} parent=1 // pred_check
      _
    $region3: #{tpu_custom_call.1} parent=1 // pred_check_branch
      %17 = sbr.rel (0) target = $region5
    $region4: #{tpu_custom_call.1} parent=1 // pred_region
      %s19 = ssub.s32 128, 128
      %20 = vsyncadd [#allocation3], %s19
      %s22 = sshll.u32 [#allocation2], 4
      %s23 = int_to_ptr.vmem [resolvable:$true] %s22
      %25 = dma.hbm_to_vmem [thread:$0]  %s0, 128, %s23, [#allocation3]
    $region5: #{tpu_custom_call.1} parent=1 // pred_fallthru
      _
    // Predicated region
    $region6: #{tpu_custom_call.1} parent=1 // pred_check
      _
    $region7: #{tpu_custom_call.1} parent=1 // pred_check_branch
      %27 = sbr.rel (0) target = $region9
    $region8: #{tpu_custom_call.1} parent=1 // pred_region
      %s29 = ssub.s32 512, 512
      %30 = vsyncadd [#allocation6], %s29
      %s31 = sshll.u32 [#allocation5], 4
      %s32 = int_to_ptr.vmem [resolvable:$true] %s31
      %37 = dma.hbm_to_vmem [thread:$0]  %s1, 512, %s32, [#allocation6], 128, 128, 8
    $region9: #{tpu_custom_call.1} parent=1 // pred_fallthru
      _
    // Predicated region
    $region10: #{tpu_custom_call.1} parent=1 // pred_check
      _
    $region11: #{tpu_custom_call.1} parent=1 // pred_check_branch
      %39 = sbr.rel (0) target = $region13
    $region12: #{tpu_custom_call.1} parent=1 // pred_region
      _
    $region13: #{tpu_custom_call.1} parent=1 // pred_fallthru
      _
    // Predicated region
    $region14: #{tpu_custom_call.1} parent=1 // pred_check
      _
    $region15: #{tpu_custom_call.1} parent=1 // pred_check_branch
      %41 = sbr.rel (0) target = $region17
    $region16: #{tpu_custom_call.1} parent=1 // pred_region
      %s43 = ssub.s32 2048, 2048
      %44 = vsyncadd [#allocation6], %s43
      %s45 = sshll.u32 [#allocation7], 4
      %s46 = int_to_ptr.vmem [resolvable:$true] %s45
      %51 = dma.hbm_to_vmem [thread:$0]  %s3, 2048, %s46, [#allocation6], 128, 128, 8
    $region17: #{tpu_custom_call.1} parent=1 // pred_fallthru
      _
    // Predicated region
    $region18: #{tpu_custom_call.1} parent=1 // pred_check
      _
    $region19: #{tpu_custom_call.1} parent=1 // pred_check_branch
      %53 = sbr.rel (0) target = $region21
    $region20: #{tpu_custom_call.1} parent=1 // pred_region
      _
    $region21: #{tpu_custom_call.1} parent=1 // pred_fallthru
      _
    // Predicated region
    $region22: #{tpu_custom_call.1} parent=1 // pred_check
      _
    $region23: #{tpu_custom_call.1} parent=1 // pred_check_branch
      %55 = sbr.rel (0) target = $region25
    $region24: #{tpu_custom_call.1} parent=1 // pred_region
      %s57 = ssub.s32 2048, 2048
      %58 = vsyncadd [#allocation9], %s57
      %s59 = sshll.u32 [#allocation8], 4
      %s60 = int_to_ptr.vmem [resolvable:$true] %s59
      %65 = dma.hbm_to_vmem [thread:$0]  %s5, 2048, %s60, [#allocation9], 128, 128, 8
    $region25: #{tpu_custom_call.1} parent=1 // pred_fallthru
      _
    // Predicated region
    $region26: #{tpu_custom_call.1} parent=1 // pred_check
      _
    $region27: #{tpu_custom_call.1} parent=1 // pred_check_branch
      %67 = sbr.rel (0) target = $region29
    $region28: #{tpu_custom_call.1} parent=1 // pred_region
      _
    $region29: #{tpu_custom_call.1} parent=1 // pred_fallthru
      _
    // Predicated region
    $region30: #{tpu_custom_call.1} parent=1 // pred_check
      _
    $region31: #{tpu_custom_call.1} parent=1 // pred_check_branch
      %69 = sbr.rel (0) target = $region33
    $region32: #{tpu_custom_call.1} parent=1 // pred_region
      %70 = dma.done [#allocation3], 128
    $region33: #{tpu_custom_call.1} parent=1 // pred_fallthru
      _
    // Predicated region
    $region34: #{tpu_custom_call.1} parent=1 // pred_check
      _
    $region35: #{tpu_custom_call.1} parent=1 // pred_check_branch
      %72 = sbr.rel (0) target = $region37
    $region36: #{tpu_custom_call.1} parent=1 // pred_region
      %73 = dma.done [#allocation6], 512
    $region37: #{tpu_custom_call.1} parent=1 // pred_fallthru
      _
    // Predicated region
    $region38: #{tpu_custom_call.1} parent=1 // pred_check
      _
    $region39: #{tpu_custom_call.1} parent=1 // pred_check_branch
      %75 = sbr.rel (0) target = $region41
    $region40: #{tpu_custom_call.1} parent=1 // pred_region
      %76 = dma.done [#allocation6], 2048
    $region41: #{tpu_custom_call.1} parent=1 // pred_fallthru
      _
    // Predicated region
    $region42: #{tpu_custom_call.1} parent=1 // pred_check
      _
    $region43: #{tpu_custom_call.1} parent=1 // pred_check_branch
      %78 = sbr.rel (0) target = $region45
    $region44: #{tpu_custom_call.1} parent=1 // pred_region
      %79 = dma.done [#allocation9], 2048
    $region45: #{tpu_custom_call.1} parent=1 // pred_fallthru
      _
    %v80 = vld [vmem:[#allocation2] sm:$0xff]
    %v81 = vld [vmem:[#allocation5] sm:$0xff]
    %v82 = vld [vmem:[#allocation5 + $0x8] sm:$0xff]
    %v83 = vld [vmem:[#allocation5 + $0x10] sm:$0xff]
    %v84 = vld [vmem:[#allocation5 + $0x18] sm:$0xff]
    %v85 = vld [vmem:[%s2] sm:$0x1]
    %v87 = vlaneseq
    %v88 = vshrl.u32 %v87, 7
    %v89 = vsub.s32 0, %v88
    %v90 = vrot.slane %v85, %v89
    %vm92 = vcmask 261120
    %v94 = vsel %vm92, %v80, 0
    %96 = vmatprep.subr.mxu0 0.0
    %97 = vmatpush1.msra.mxu0 %v81
    %98 = vmatprep.subr.mxu0 0.0
    %99 = vmatpush1.msra.mxu0 %v82
    %100 = vmatprep.subr.mxu0 0.0
    %101 = vmatpush1.msra.mxu0 %v83
    %102 = vmatprep.subr.mxu0 0.0
    %103 = vmatpush1.msra.mxu0 %v84
    %104 = vmatprep.subr.mxu0 0.0
    %105 = vmatpush1.msra.mxu0 0.0
    %106 = vmatprep.subr.mxu0 0.0
    %107 = vmatpush1.msra.mxu0 0.0
    %108 = vmatprep.subr.mxu0 0.0
    %109 = vmatpush1.msra.mxu0 0.0
    %110 = vmatprep.subr.mxu0 0.0
    %111 = vmatpush1.msra.mxu0 0.0
    %112 = vmatprep.subr.mxu0 0.0
    %113 = vmatpush1.msra.mxu0 0.0
    %114 = vmatprep.subr.mxu0 0.0
    %115 = vmatpush1.msra.mxu0 0.0
    %116 = vmatprep.subr.mxu0 0.0
    %117 = vmatpush1.msra.mxu0 0.0
    %118 = vmatprep.subr.mxu0 0.0
    %119 = vmatpush1.msra.mxu0 0.0
    %120 = vmatprep.subr.mxu0 0.0
    %121 = vmatpush1.msra.mxu0 0.0
    %122 = vmatprep.subr.mxu0 0.0
    %123 = vmatpush1.msra.mxu0 0.0
    %124 = vmatprep.subr.mxu0 0.0
    %125 = vmatpush1.msra.mxu0 0.0
    %126 = vmatprep.subr.mxu0 0.0
    %127 = vmatpush1.msra.mxu0 0.0
    %128 = vmatprep.subr.mxu0 0.0
    %129 = vmatpush1.msra.mxu0 0.0
    %130 = vmatprep.subr.mxu0 0.0
    %131 = vmatpush1.msra.mxu0 0.0
    %132 = vmatprep.subr.mxu0 0.0
    %133 = vmatpush1.msra.mxu0 0.0
    %134 = vmatprep.subr.mxu0 0.0
    %135 = vmatpush1.msra.mxu0 0.0
    %136 = vmatprep.subr.mxu0 0.0
    %137 = vmatpush1.msra.mxu0 0.0
    %138 = vmatprep.subr.mxu0 0.0
    %139 = vmatpush1.msra.mxu0 0.0
    %140 = vmatprep.subr.mxu0 0.0
    %141 = vmatpush1.msra.mxu0 0.0
    %142 = vmatprep.subr.mxu0 0.0
    %143 = vmatpush1.msra.mxu0 0.0
    %144 = vmatprep.subr.mxu0 0.0
    %145 = vmatpush1.msra.mxu0 0.0
    %146 = vmatprep.subr.mxu0 0.0
    %147 = vmatpush1.msra.mxu0 0.0
    %148 = vmatprep.subr.mxu0 0.0
    %149 = vmatpush1.msra.mxu0 0.0
    %150 = vmatprep.subr.mxu0 0.0
    %151 = vmatpush1.msra.mxu0 0.0
    %152 = vmatprep.subr.mxu0 0.0
    %153 = vmatpush1.msra.mxu0 0.0
    %154 = vmatprep.subr.mxu0 0.0
    %155 = vmatpush1.msra.mxu0 0.0
    %156 = vmatprep.subr.mxu0 0.0
    %157 = vmatpush1.msra.mxu0 0.0
    %158 = vmatprep.subr.mxu0 0.0
    %159 = vmatpush1.msra.mxu0 0.0
    %160 = vmatprep.mubr.f32.mxu0 0.0
    %161 = vmatmul.mubr.f32.gmra.mrb[0].mxu0 %v94
    %v162 = vpop.f32.mrb[0].mxu0
    %v163 = vadd.f32 %v90, %v162
    %v164 = vpop.f32.mrb[0].mxu0
    %165 = vdwg.mxu0
    %v166 = vmax.f32 %v163, 0.0
    %v167 = vld [vmem:[#allocation7] sm:$0xff]
    %v168 = vld [vmem:[#allocation7 + $0x8] sm:$0xff]
    %v169 = vld [vmem:[#allocation7 + $0x10] sm:$0xff]
    %v170 = vld [vmem:[#allocation7 + $0x18] sm:$0xff]
    %v171 = vld [vmem:[#allocation7 + $0x20] sm:$0xff]
    %v172 = vld [vmem:[#allocation7 + $0x28] sm:$0xff]
    %v173 = vld [vmem:[#allocation7 + $0x30] sm:$0xff]
    %v174 = vld [vmem:[#allocation7 + $0x38] sm:$0xff]
    %v175 = vld [vmem:[#allocation7 + $0x40] sm:$0xff]
    %v176 = vld [vmem:[#allocation7 + $0x48] sm:$0xff]
    %v177 = vld [vmem:[#allocation7 + $0x50] sm:$0xff]
    %v178 = vld [vmem:[#allocation7 + $0x58] sm:$0xff]
    %v179 = vld [vmem:[#allocation7 + $0x60] sm:$0xff]
    %v180 = vld [vmem:[#allocation7 + $0x68] sm:$0xff]
    %v181 = vld [vmem:[#allocation7 + $0x70] sm:$0xff]
    %v182 = vld [vmem:[#allocation7 + $0x78] sm:$0xff]
    %v183 = vld [vmem:[%s4] sm:$0x1]
    %v185 = vlaneseq
    %v186 = vshrl.u32 %v185, 7
    %v187 = vsub.s32 0, %v186
    %v188 = vrot.slane %v183, %v187
    %190 = vmatprep.subr.mxu0 0.0
    %191 = vmatpush1.msra.mxu0 %v167
    %192 = vmatprep.subr.mxu0 0.0
    %193 = vmatpush1.msra.mxu0 %v168
    %194 = vmatprep.subr.mxu0 0.0
    %195 = vmatpush1.msra.mxu0 %v169
    %196 = vmatprep.subr.mxu0 0.0
    %197 = vmatpush1.msra.mxu0 %v170
    %198 = vmatprep.subr.mxu0 0.0
    %199 = vmatpush1.msra.mxu0 %v171
    %200 = vmatprep.subr.mxu0 0.0
    %201 = vmatpush1.msra.mxu0 %v172
    %202 = vmatprep.subr.mxu0 0.0
    %203 = vmatpush1.msra.mxu0 %v173
    %204 = vmatprep.subr.mxu0 0.0
    %205 = vmatpush1.msra.mxu0 %v174
    %206 = vmatprep.subr.mxu0 0.0
    %207 = vmatpush1.msra.mxu0 %v175
    %208 = vmatprep.subr.mxu0 0.0
    %209 = vmatpush1.msra.mxu0 %v176
    %210 = vmatprep.subr.mxu0 0.0
    %211 = vmatpush1.msra.mxu0 %v177
    %212 = vmatprep.subr.mxu0 0.0
    %213 = vmatpush1.msra.mxu0 %v178
    %214 = vmatprep.subr.mxu0 0.0
    %215 = vmatpush1.msra.mxu0 %v179
    %216 = vmatprep.subr.mxu0 0.0
    %217 = vmatpush1.msra.mxu0 %v180
    %218 = vmatprep.subr.mxu0 0.0
    %219 = vmatpush1.msra.mxu0 %v181
    %220 = vmatprep.subr.mxu0 0.0
    %221 = vmatpush1.msra.mxu0 %v182
    %222 = vmatprep.subr.mxu0 0.0
    %223 = vmatpush1.msra.mxu0 0.0
    %224 = vmatprep.subr.mxu0 0.0
    %225 = vmatpush1.msra.mxu0 0.0
    %226 = vmatprep.subr.mxu0 0.0
    %227 = vmatpush1.msra.mxu0 0.0
    %228 = vmatprep.subr.mxu0 0.0
    %229 = vmatpush1.msra.mxu0 0.0
    %230 = vmatprep.subr.mxu0 0.0
    %231 = vmatpush1.msra.mxu0 0.0
    %232 = vmatprep.subr.mxu0 0.0
    %233 = vmatpush1.msra.mxu0 0.0
    %234 = vmatprep.subr.mxu0 0.0
    %235 = vmatpush1.msra.mxu0 0.0
    %236 = vmatprep.subr.mxu0 0.0
    %237 = vmatpush1.msra.mxu0 0.0
    %238 = vmatprep.subr.mxu0 0.0
    %239 = vmatpush1.msra.mxu0 0.0
    %240 = vmatprep.subr.mxu0 0.0
    %241 = vmatpush1.msra.mxu0 0.0
    %242 = vmatprep.subr.mxu0 0.0
    %243 = vmatpush1.msra.mxu0 0.0
    %244 = vmatprep.subr.mxu0 0.0
    %245 = vmatpush1.msra.mxu0 0.0
    %246 = vmatprep.subr.mxu0 0.0
    %247 = vmatpush1.msra.mxu0 0.0
    %248 = vmatprep.subr.mxu0 0.0
    %249 = vmatpush1.msra.mxu0 0.0
    %250 = vmatprep.subr.mxu0 0.0
    %251 = vmatpush1.msra.mxu0 0.0
    %252 = vmatprep.subr.mxu0 0.0
    %253 = vmatpush1.msra.mxu0 0.0
    %254 = vmatprep.mubr.f32.mxu0 0.0
    %255 = vmatmul.mubr.f32.gmra.mrb[0].mxu0 %v166
    %v256 = vpop.f32.mrb[0].mxu0
    %v257 = vadd.f32 %v188, %v256
    %v258 = vpop.f32.mrb[0].mxu0
    %259 = vdwg.mxu0
    %v260 = vmax.f32 %v257, 0.0
    %v261 = vld [vmem:[#allocation8] sm:$0xff]
    %v262 = vld [vmem:[#allocation8 + $0x8] sm:$0xff]
    %v263 = vld [vmem:[#allocation8 + $0x10] sm:$0xff]
    %v264 = vld [vmem:[#allocation8 + $0x18] sm:$0xff]
    %v265 = vld [vmem:[#allocation8 + $0x20] sm:$0xff]
    %v266 = vld [vmem:[#allocation8 + $0x28] sm:$0xff]
    %v267 = vld [vmem:[#allocation8 + $0x30] sm:$0xff]
    %v268 = vld [vmem:[#allocation8 + $0x38] sm:$0xff]
    %v269 = vld [vmem:[#allocation8 + $0x40] sm:$0xff]
    %v270 = vld [vmem:[#allocation8 + $0x48] sm:$0xff]
    %v271 = vld [vmem:[#allocation8 + $0x50] sm:$0xff]
    %v272 = vld [vmem:[#allocation8 + $0x58] sm:$0xff]
    %v273 = vld [vmem:[#allocation8 + $0x60] sm:$0xff]
    %v274 = vld [vmem:[#allocation8 + $0x68] sm:$0xff]
    %v275 = vld [vmem:[#allocation8 + $0x70] sm:$0xff]
    %v276 = vld [vmem:[#allocation8 + $0x78] sm:$0xff]
    %v277 = vld [vmem:[%s6] sm:$0x1]
    %v279 = vlaneseq
    %v280 = vshrl.u32 %v279, 7
    %v281 = vsub.s32 0, %v280
    %v282 = vrot.slane %v277, %v281
    %284 = vmatprep.subr.mxu0 0.0
    %285 = vmatpush1.msra.mxu0 %v261
    %286 = vmatprep.subr.mxu0 0.0
    %287 = vmatpush1.msra.mxu0 %v262
    %288 = vmatprep.subr.mxu0 0.0
    %289 = vmatpush1.msra.mxu0 %v263
    %290 = vmatprep.subr.mxu0 0.0
    %291 = vmatpush1.msra.mxu0 %v264
    %292 = vmatprep.subr.mxu0 0.0
    %293 = vmatpush1.msra.mxu0 %v265
    %294 = vmatprep.subr.mxu0 0.0
    %295 = vmatpush1.msra.mxu0 %v266
    %296 = vmatprep.subr.mxu0 0.0
    %297 = vmatpush1.msra.mxu0 %v267
    %298 = vmatprep.subr.mxu0 0.0
    %299 = vmatpush1.msra.mxu0 %v268
    %300 = vmatprep.subr.mxu0 0.0
    %301 = vmatpush1.msra.mxu0 %v269
    %302 = vmatprep.subr.mxu0 0.0
    %303 = vmatpush1.msra.mxu0 %v270
    %304 = vmatprep.subr.mxu0 0.0
    %305 = vmatpush1.msra.mxu0 %v271
    %306 = vmatprep.subr.mxu0 0.0
    %307 = vmatpush1.msra.mxu0 %v272
    %308 = vmatprep.subr.mxu0 0.0
    %309 = vmatpush1.msra.mxu0 %v273
    %310 = vmatprep.subr.mxu0 0.0
    %311 = vmatpush1.msra.mxu0 %v274
    %312 = vmatprep.subr.mxu0 0.0
    %313 = vmatpush1.msra.mxu0 %v275
    %314 = vmatprep.subr.mxu0 0.0
    %315 = vmatpush1.msra.mxu0 %v276
    %316 = vmatprep.subr.mxu0 0.0
    %317 = vmatpush1.msra.mxu0 0.0
    %318 = vmatprep.subr.mxu0 0.0
    %319 = vmatpush1.msra.mxu0 0.0
    %320 = vmatprep.subr.mxu0 0.0
    %321 = vmatpush1.msra.mxu0 0.0
    %322 = vmatprep.subr.mxu0 0.0
    %323 = vmatpush1.msra.mxu0 0.0
    %324 = vmatprep.subr.mxu0 0.0
    %325 = vmatpush1.msra.mxu0 0.0
    %326 = vmatprep.subr.mxu0 0.0
    %327 = vmatpush1.msra.mxu0 0.0
    %328 = vmatprep.subr.mxu0 0.0
    %329 = vmatpush1.msra.mxu0 0.0
    %330 = vmatprep.subr.mxu0 0.0
    %331 = vmatpush1.msra.mxu0 0.0
    %332 = vmatprep.subr.mxu0 0.0
    %333 = vmatpush1.msra.mxu0 0.0
    %334 = vmatprep.subr.mxu0 0.0
    %335 = vmatpush1.msra.mxu0 0.0
    %336 = vmatprep.subr.mxu0 0.0
    %337 = vmatpush1.msra.mxu0 0.0
    %338 = vmatprep.subr.mxu0 0.0
    %339 = vmatpush1.msra.mxu0 0.0
    %340 = vmatprep.subr.mxu0 0.0
    %341 = vmatpush1.msra.mxu0 0.0
    %342 = vmatprep.subr.mxu0 0.0
    %343 = vmatpush1.msra.mxu0 0.0
    %344 = vmatprep.subr.mxu0 0.0
    %345 = vmatpush1.msra.mxu0 0.0
    %346 = vmatprep.subr.mxu0 0.0
    %347 = vmatpush1.msra.mxu0 0.0
    %348 = vmatprep.mubr.f32.mxu0 0.0
    %349 = vmatmul.mubr.f32.gmra.mrb[0].mxu0 %v260
    %v350 = vpop.f32.mrb[0].mxu0
    %v351 = vadd.f32 %v282, %v350
    %v352 = vpop.f32.mrb[0].mxu0
    %353 = vdwg.mxu0
    %v354 = vsub.f32 0.0, %v351
    %v355 = vmul.f32 %v354, 1.442695
    %v356 = vpow.pop %v355
    %v357 = vadd.f32 %v356, 1.0
    %v358 = vrcp.pop %v357
    %v359 = vmul.f32 1.0, %v358
    %360 = vst [vmem:[#allocation10] sm:$0xff] %v359
    // Predicated region
    $region46: #{tpu_custom_call.1} parent=1 // pred_check
      _
    $region47: #{tpu_custom_call.1} parent=1 // pred_check_branch
      %362 = sbr.rel (0) target = $region49
    $region48: #{tpu_custom_call.1} parent=1 // pred_region
      %s364 = ssub.s32 128, 128
      %365 = vsyncadd [#allocation4], %s364
      %s367 = sshll.u32 [#allocation10], 4
      %s368 = int_to_ptr.vmem [resolvable:$true] %s367
      %370 = dma.vmem_to_hbm [thread:$0]  %s368, 128, %s7, [#allocation4]
    $region49: #{tpu_custom_call.1} parent=1 // pred_fallthru
      _
    // Predicated region
    $region50: #{tpu_custom_call.1} parent=1 // pred_check
      _
    $region51: #{tpu_custom_call.1} parent=1 // pred_check_branch
      %372 = sbr.rel (0) target = $region53
    $region52: #{tpu_custom_call.1} parent=1 // pred_region
      %373 = dma.done [#allocation4], 128
    $region53: #{tpu_custom_call.1} parent=1 // pred_fallthru
      _
    %374 = vsyncpa [#allocation3], 1
    %375 = vsyncpa [#allocation6], 1
    %376 = vsyncpa [#allocation9], 1
    %377 = vsyncpa [#allocation4], 1

</llo_original>
